<compile_context>
chip_gen: v5e
topology: v5e:2x2
jax: 0.10.0
libtpu: 0.0.40
codegen_flags: <defaults>
</compile_context>

<pallas_src>
import jax
import jax.numpy as jnp
from jax import lax
from jax.experimental import pallas as pl
from jax.experimental.pallas import tpu as pltpu


def _linear_t_kernel(w_ref, x_ref, b_ref, o_ref):
    # w_ref: (F_out, F_in), x_ref: (tm, F_in), b_ref: (F_out, 1)
    # o_ref: (F_out, tm)  — lane dim is the batch tile -> dense stores.
    acc = lax.dot_general(
        w_ref[...], x_ref[...],
        dimension_numbers=(((1,), (1,)), ((), ())),   # contract F_in of both
        preferred_element_type=jnp.float32,
    )
    o_ref[...] = (acc + b_ref[...]).astype(o_ref.dtype)


def prepare_params(w, b):
    """One-time parameter prep (init time, NOT per forward call).

    w: (F_out, F_in) PyTorch nn.Linear layout — kept as-is.
    b: (F_out,) — reshaped to a (F_out, 1) column so it broadcasts over the
       lane (batch) dimension inside the kernel.
    """
    return w, b.reshape(-1, 1)


@jax.jit
def linear_forward(x, w, b_col):
    """x: (B, F_in) f32; w: (F_out, F_in); b_col: (F_out, 1).

    Returns (B, F_out) f32, identical to x @ W^T + b.
    """
    B, f_in = x.shape
    f_out = w.shape[0]

    # One big batch tile when it fits (grid=(1,) for this module's full-table
    # forwards); only tile for very large tables.  tm is a multiple of 128 so
    # the output lane dim stays dense; a ragged last tile is masked by Pallas.
    tm = min(1024, pl.cdiv(B, 128) * 128)
    grid = (pl.cdiv(B, tm),)

    out_t = pl.pallas_call(
        _linear_t_kernel,
        out_shape=jax.ShapeDtypeStruct((f_out, B), x.dtype),
        grid=grid,
        in_specs=[
            # Weight + bias: tiny, replicated full blocks (resident in VMEM).
            pl.BlockSpec((f_out, f_in), lambda i: (0, 0)),
            # x: one (tm, F_in) batch tile per grid step.
            pl.BlockSpec((tm, f_in), lambda i: (i, 0)),
            pl.BlockSpec((f_out, 1), lambda i: (0, 0)),
        ],
        # Transposed, lane-dense output block: last dim is tm (multiple of 128).
        out_specs=pl.BlockSpec((f_out, tm), lambda i: (0, i)),
        compiler_params=pltpu.CompilerParams(
            # grid is (1,) at this problem size; only worth marking batch tiles
            # "parallel" (megacore) if B grows to tens of thousands of rows.
            dimension_semantics=("arbitrary",),
        ),
        cost_estimate=pl.CostEstimate(
            flops=2 * B * f_in * f_out,               # true FLOPs, no padding
            transcendentals=0,
            bytes_accessed=4 * (B * f_in + f_out * f_in + f_out + f_out * B),
        ),
    )(w, x, b_col)

    # Single cheap (F_out, B) -> (B, F_out) transpose instead of the old
    # 16x zero-padded writeback + post-kernel slice.
    return out_t.T


if __name__ == "__main__":
    # Shapes consistent with the module: it forwards the *entire* train/test
    # table at once, so the batch is the dataset size.
    batch = 512          # dataset rows (full-table forward, as in run()/predict())
    in_features = 32     # == len(data_manager.train_x.columns)
    out_features = 8     # == len(data_manager.train_y.columns)

    key = jax.random.PRNGKey(0)
    kx, kw, kb = jax.random.split(key, 3)

    x = jax.random.normal(kx, (batch, in_features), dtype=jnp.float32)

    # PyTorch nn.Linear stores W as (out, in); params are prepared once.
    w = jax.random.normal(kw, (out_features, in_features), dtype=jnp.float32) * 0.1
    b = jax.random.normal(kb, (out_features,), dtype=jnp.float32) * 0.1
    w_prep, b_col = prepare_params(w, b)

    y = linear_forward(x, w_prep, b_col)
    jax.block_until_ready(y)

    # Reference check against plain JAX (same math as nn.Linear forward).
    y_ref = x @ w.T + b
    assert y.shape == (batch, out_features), y.shape
    assert jnp.allclose(y, y_ref, atol=1e-5, rtol=1e-5)

    # TODO(synk): the training loop (MSELoss + SGD in `run`) is host-side
    # optimization logic, not part of forward(); not implemented as a kernel.
    print("KERNEL_OK")
</pallas_src>

<mosaic_0001>
module attributes {stable_mosaic.version = 11 : i64} {
  func.func @_linear_t_kernel(%arg0: i32, %arg1: memref<8x32xf32, #tpu.memory_space<vmem>>, %arg2: memref<512x32xf32, #tpu.memory_space<vmem>>, %arg3: memref<8x1xf32, #tpu.memory_space<vmem>>, %arg4: memref<8x512xf32, #tpu.memory_space<vmem>>) attributes {dimension_semantics = [#tpu.dimension_semantics<arbitrary>], iteration_bounds = array<i64: 1>, scalar_prefetch = 0 : i64, scratch_operands = 0 : i64, tpu.core_type = #tpu.core_type<tc>, window_params = [{pipeline_mode = #tpu.pipeline_mode<synchronous>, transform_indices = @transform_0, window_bounds = array<i64: 8, 32>}, {transform_indices = @transform_1, window_bounds = array<i64: 512, 32>}, {pipeline_mode = #tpu.pipeline_mode<synchronous>, transform_indices = @transform_2, window_bounds = array<i64: 8, 1>}, {transform_indices = @transform_3, window_bounds = array<i64: 8, 512>}]} {
    %c0 = arith.constant 0 : index
    %c0_0 = arith.constant 0 : index
    %0 = vector.load %arg1[%c0, %c0_0] : memref<8x32xf32, #tpu.memory_space<vmem>>, vector<8x32xf32>
    %c0_1 = arith.constant 0 : index
    %c0_2 = arith.constant 0 : index
    %1 = vector.load %arg2[%c0_1, %c0_2] : memref<512x32xf32, #tpu.memory_space<vmem>>, vector<512x32xf32>
    %cst = arith.constant dense<0.000000e+00> : vector<8x512xf32>
    %2 = tpu.matmul %0, %1, %cst {dimension_numbers = #tpu.dot_dimension_numbers<[1], [1], [0], [0], [0, 0, 1, 0], [], []>} : vector<8x32xf32>, vector<512x32xf32>, vector<8x512xf32> -> vector<8x512xf32>
    %c0_3 = arith.constant 0 : index
    %c0_4 = arith.constant 0 : index
    %3 = vector.load %arg3[%c0_3, %c0_4] : memref<8x1xf32, #tpu.memory_space<vmem>>, vector<8x1xf32>
    %4 = vector.broadcast %3 : vector<8x1xf32> to vector<8x512xf32>
    %5 = arith.addf %2, %4 : vector<8x512xf32>
    %c0_5 = arith.constant 0 : index
    %c0_6 = arith.constant 0 : index
    %6 = vector.load %arg4[%c0_5, %c0_6] : memref<8x512xf32, #tpu.memory_space<vmem>>, vector<8x512xf32>
    tpu.vector_store %arg4[%c0_5, %c0_6], %5 {strides = array<i32>} : memref<8x512xf32, #tpu.memory_space<vmem>>, vector<8x512xf32>,
    return
  }
  func.func @transform_0(%arg0: i32) -> (i32, i32) {
    %c0_i32 = arith.constant 0 : i32
    %c0_i32_0 = arith.constant 0 : i32
    %c0_i32_1 = arith.constant 0 : i32
    return %c0_i32, %c0_i32_0 : i32, i32
  }
  func.func @transform_1(%arg0: i32) -> (i32, i32) {
    %c0_i32 = arith.constant 0 : i32
    %c0_i32_0 = arith.constant 0 : i32
    return %arg0, %c0_i32 : i32, i32
  }
  func.func @transform_2(%arg0: i32) -> (i32, i32) {
    %c0_i32 = arith.constant 0 : i32
    %c0_i32_0 = arith.constant 0 : i32
    %c0_i32_1 = arith.constant 0 : i32
    return %c0_i32, %c0_i32_0 : i32, i32
  }
  func.func @transform_3(%arg0: i32) -> (i32, i32) {
    %c0_i32 = arith.constant 0 : i32
    %c0_i32_0 = arith.constant 0 : i32
    return %c0_i32, %arg0 : i32, i32
  }
}

</mosaic_0001>

<llo_original>
// kernel: linear_forward.1
$region0: #{linear_forward.1}
  #allocation0 [shape = 'u32[]', space=smem, size = 0x4, offset = 0x4, fixed_abs, tag = 'smem constant byte address 0x4 - core index']
  #allocation1 [shape = 'u32[72,128]{1,0:T(1,128)}', space=vmem, size = 0x9000, scoped, tag = 'internal scratch']
  %s0 = inlined_call_operand.vmem [shape: f32[8,32], index: 0, kind: input, shape index: {}]
  %s1 = inlined_call_operand.vmem [shape: f32[512,32], index: 1, kind: input, shape index: {}]
  %s2 = inlined_call_operand.vmem [shape: f32[8,1], index: 2, kind: input, shape index: {}]
  %s3 = inlined_call_operand.hbm [shape: f32[8,512], index: 3, kind: output, shape index: {}]
  %s4 = sld [smem:[#allocation0]]
  $region22: #{linear_forward.1} parent=0
    _
  %s6 = ssub.s32 1, %s4
  %s7 = scalar_select 0, %s6, %s4
  $region1: #{linear_forward.1} parent=0
    #allocation2 [shape = 'u8[16384]{0}', space=vmem, size = 0x4000, scoped, tag = 'output window, operand 0, single buffered']
    #allocation3 [shape = 's32[1]{0}', space=sflag, size = 0x4, scoped, tag = 'scoped memory for linear_forward.1']
    %8 = vsyncpa [#allocation3], 0
    // Predicated region
    $region2: #{linear_forward.1} parent=1 // pred_check
      _
    $region3: #{linear_forward.1} parent=1 // pred_check_branch
      %10 = sbr.rel (0) target = $region5
    $region4: #{linear_forward.1} parent=1 // pred_region
      _
    $region5: #{linear_forward.1} parent=1 // pred_fallthru
      _
    // Predicated region
    $region6: #{linear_forward.1} parent=1 // pred_check
      _
    $region7: #{linear_forward.1} parent=1 // pred_check_branch
      %12 = sbr.rel (0) target = $region9
    $region8: #{linear_forward.1} parent=1 // pred_region
      _
    $region9: #{linear_forward.1} parent=1 // pred_fallthru
      _
    // Predicated region
    $region10: #{linear_forward.1} parent=1 // pred_check
      _
    $region11: #{linear_forward.1} parent=1 // pred_check_branch
      %14 = sbr.rel (0) target = $region13
    $region12: #{linear_forward.1} parent=1 // pred_region
      _
    $region13: #{linear_forward.1} parent=1 // pred_fallthru
      _
    %v15 = vld [vmem:[%s0] sm:$0xff]
    %v16 = vld [vmem:[%s1] sm:$0xff]
    %v17 = vld [vmem:[%s1 + $0x8] sm:$0xff]
    %v18 = vld [vmem:[%s1 + $0x10] sm:$0xff]
    %v19 = vld [vmem:[%s1 + $0x18] sm:$0xff]
    %v20 = vld [vmem:[%s1 + $0x20] sm:$0xff]
    %v21 = vld [vmem:[%s1 + $0x28] sm:$0xff]
    %v22 = vld [vmem:[%s1 + $0x30] sm:$0xff]
    %v23 = vld [vmem:[%s1 + $0x38] sm:$0xff]
    %v24 = vld [vmem:[%s1 + $0x40] sm:$0xff]
    %v25 = vld [vmem:[%s1 + $0x48] sm:$0xff]
    %v26 = vld [vmem:[%s1 + $0x50] sm:$0xff]
    %v27 = vld [vmem:[%s1 + $0x58] sm:$0xff]
    %v28 = vld [vmem:[%s1 + $0x60] sm:$0xff]
    %v29 = vld [vmem:[%s1 + $0x68] sm:$0xff]
    %v30 = vld [vmem:[%s1 + $0x70] sm:$0xff]
    %v31 = vld [vmem:[%s1 + $0x78] sm:$0xff]
    %v32 = vld [vmem:[%s1 + $0x80] sm:$0xff]
    %v33 = vld [vmem:[%s1 + $0x88] sm:$0xff]
    %v34 = vld [vmem:[%s1 + $0x90] sm:$0xff]
    %v35 = vld [vmem:[%s1 + $0x98] sm:$0xff]
    %v36 = vld [vmem:[%s1 + $0xa0] sm:$0xff]
    %v37 = vld [vmem:[%s1 + $0xa8] sm:$0xff]
    %v38 = vld [vmem:[%s1 + $0xb0] sm:$0xff]
    %v39 = vld [vmem:[%s1 + $0xb8] sm:$0xff]
    %v40 = vld [vmem:[%s1 + $0xc0] sm:$0xff]
    %v41 = vld [vmem:[%s1 + $0xc8] sm:$0xff]
    %v42 = vld [vmem:[%s1 + $0xd0] sm:$0xff]
    %v43 = vld [vmem:[%s1 + $0xd8] sm:$0xff]
    %v44 = vld [vmem:[%s1 + $0xe0] sm:$0xff]
    %v45 = vld [vmem:[%s1 + $0xe8] sm:$0xff]
    %v46 = vld [vmem:[%s1 + $0xf0] sm:$0xff]
    %v47 = vld [vmem:[%s1 + $0xf8] sm:$0xff]
    %v48 = vld [vmem:[%s1 + $0x100] sm:$0xff]
    %v49 = vld [vmem:[%s1 + $0x108] sm:$0xff]
    %v50 = vld [vmem:[%s1 + $0x110] sm:$0xff]
    %v51 = vld [vmem:[%s1 + $0x118] sm:$0xff]
    %v52 = vld [vmem:[%s1 + $0x120] sm:$0xff]
    %v53 = vld [vmem:[%s1 + $0x128] sm:$0xff]
    %v54 = vld [vmem:[%s1 + $0x130] sm:$0xff]
    %v55 = vld [vmem:[%s1 + $0x138] sm:$0xff]
    %v56 = vld [vmem:[%s1 + $0x140] sm:$0xff]
    %v57 = vld [vmem:[%s1 + $0x148] sm:$0xff]
    %v58 = vld [vmem:[%s1 + $0x150] sm:$0xff]
    %v59 = vld [vmem:[%s1 + $0x158] sm:$0xff]
    %v60 = vld [vmem:[%s1 + $0x160] sm:$0xff]
    %v61 = vld [vmem:[%s1 + $0x168] sm:$0xff]
    %v62 = vld [vmem:[%s1 + $0x170] sm:$0xff]
    %v63 = vld [vmem:[%s1 + $0x178] sm:$0xff]
    %v64 = vld [vmem:[%s1 + $0x180] sm:$0xff]
    %v65 = vld [vmem:[%s1 + $0x188] sm:$0xff]
    %v66 = vld [vmem:[%s1 + $0x190] sm:$0xff]
    %v67 = vld [vmem:[%s1 + $0x198] sm:$0xff]
    %v68 = vld [vmem:[%s1 + $0x1a0] sm:$0xff]
    %v69 = vld [vmem:[%s1 + $0x1a8] sm:$0xff]
    %v70 = vld [vmem:[%s1 + $0x1b0] sm:$0xff]
    %v71 = vld [vmem:[%s1 + $0x1b8] sm:$0xff]
    %v72 = vld [vmem:[%s1 + $0x1c0] sm:$0xff]
    %v73 = vld [vmem:[%s1 + $0x1c8] sm:$0xff]
    %v74 = vld [vmem:[%s1 + $0x1d0] sm:$0xff]
    %v75 = vld [vmem:[%s1 + $0x1d8] sm:$0xff]
    %v76 = vld [vmem:[%s1 + $0x1e0] sm:$0xff]
    %v77 = vld [vmem:[%s1 + $0x1e8] sm:$0xff]
    %v78 = vld [vmem:[%s1 + $0x1f0] sm:$0xff]
    %v79 = vld [vmem:[%s1 + $0x1f8] sm:$0xff]
    %v80 = vld [vmem:[%s2] sm:$0xff]
    %82 = vset.pattern.permute.xlu0 0
    %83 = vperm.xlu0 %82, %v80
    %v84 = vpop.permute.xlu0 %83
    %vm86 = vcmask 261120
    %v88 = vsel %vm86, %v15, 0
    %v91 = vsel %vm86, %v16, 0
    %v94 = vsel %vm86, %v17, 0
    %v97 = vsel %vm86, %v18, 0
    %v100 = vsel %vm86, %v19, 0
    %v103 = vsel %vm86, %v20, 0
    %v106 = vsel %vm86, %v21, 0
    %v109 = vsel %vm86, %v22, 0
    %v112 = vsel %vm86, %v23, 0
    %v115 = vsel %vm86, %v24, 0
    %v118 = vsel %vm86, %v25, 0
    %v121 = vsel %vm86, %v26, 0
    %v124 = vsel %vm86, %v27, 0
    %v127 = vsel %vm86, %v28, 0
    %v130 = vsel %vm86, %v29, 0
    %v133 = vsel %vm86, %v30, 0
    %v136 = vsel %vm86, %v31, 0
    %v139 = vsel %vm86, %v32, 0
    %v142 = vsel %vm86, %v33, 0
    %v145 = vsel %vm86, %v34, 0
    %v148 = vsel %vm86, %v35, 0
    %v151 = vsel %vm86, %v36, 0
    %v154 = vsel %vm86, %v37, 0
    %v157 = vsel %vm86, %v38, 0
    %v160 = vsel %vm86, %v39, 0
    %v163 = vsel %vm86, %v40, 0
    %v166 = vsel %vm86, %v41, 0
    %v169 = vsel %vm86, %v42, 0
    %v172 = vsel %vm86, %v43, 0
    %v175 = vsel %vm86, %v44, 0
    %v178 = vsel %vm86, %v45, 0
    %v181 = vsel %vm86, %v46, 0
    %v184 = vsel %vm86, %v47, 0
    %v187 = vsel %vm86, %v48, 0
    %v190 = vsel %vm86, %v49, 0
    %v193 = vsel %vm86, %v50, 0
    %v196 = vsel %vm86, %v51, 0
    %v199 = vsel %vm86, %v52, 0
    %v202 = vsel %vm86, %v53, 0
    %v205 = vsel %vm86, %v54, 0
    %v208 = vsel %vm86, %v55, 0
    %v211 = vsel %vm86, %v56, 0
    %v214 = vsel %vm86, %v57, 0
    %v217 = vsel %vm86, %v58, 0
    %v220 = vsel %vm86, %v59, 0
    %v223 = vsel %vm86, %v60, 0
    %v226 = vsel %vm86, %v61, 0
    %v229 = vsel %vm86, %v62, 0
    %v232 = vsel %vm86, %v63, 0
    %v235 = vsel %vm86, %v64, 0
    %v238 = vsel %vm86, %v65, 0
    %v241 = vsel %vm86, %v66, 0
    %v244 = vsel %vm86, %v67, 0
    %v247 = vsel %vm86, %v68, 0
    %v250 = vsel %vm86, %v69, 0
    %v253 = vsel %vm86, %v70, 0
    %v256 = vsel %vm86, %v71, 0
    %v259 = vsel %vm86, %v72, 0
    %v262 = vsel %vm86, %v73, 0
    %v265 = vsel %vm86, %v74, 0
    %v268 = vsel %vm86, %v75, 0
    %v271 = vsel %vm86, %v76, 0
    %v274 = vsel %vm86, %v77, 0
    %v277 = vsel %vm86, %v78, 0
    %v280 = vsel %vm86, %v79, 0
    %282 = vmatpush.xpose.msra.mxu0 %v136
    %283 = vmatpush.xpose.msra.mxu0 %v133
    %284 = vmatpush.xpose.msra.mxu0 %v130
    %285 = vmatpush.xpose.msra.mxu0 %v127
    %286 = vmatpush.xpose.msra.mxu0 %v124
    %287 = vmatpush.xpose.msra.mxu0 %v121
    %288 = vmatpush.xpose.msra.mxu0 %v118
    %289 = vmatpush.xpose.msra.mxu0 %v115
    %290 = vmatpush.xpose.msra.mxu0 %v112
    %291 = vmatpush.xpose.msra.mxu0 %v109
    %292 = vmatpush.xpose.msra.mxu0 %v106
    %293 = vmatpush.xpose.msra.mxu0 %v103
    %294 = vmatpush.xpose.msra.mxu0 %v100
    %295 = vmatpush.xpose.msra.mxu0 %v97
    %296 = vmatpush.xpose.msra.mxu0 %v94
    %297 = vmatpush.xpose.msra.mxu0 %v91
    %298 = vmatmul.f32.gmra.mxu0 %v88
    %v299 = vpop.f32.mrf.mxu0
    %v300 = vadd.f32 %v84, %v299
    %301 = vdwg.mxu0
    %302 = vmatpush.xpose.msra.mxu0 %v184
    %303 = vmatpush.xpose.msra.mxu0 %v181
    %304 = vmatpush.xpose.msra.mxu0 %v178
    %305 = vmatpush.xpose.msra.mxu0 %v175
    %306 = vmatpush.xpose.msra.mxu0 %v172
    %307 = vmatpush.xpose.msra.mxu0 %v169
    %308 = vmatpush.xpose.msra.mxu0 %v166
    %309 = vmatpush.xpose.msra.mxu0 %v163
    %310 = vmatpush.xpose.msra.mxu0 %v160
    %311 = vmatpush.xpose.msra.mxu0 %v157
    %312 = vmatpush.xpose.msra.mxu0 %v154
    %313 = vmatpush.xpose.msra.mxu0 %v151
    %314 = vmatpush.xpose.msra.mxu0 %v148
    %315 = vmatpush.xpose.msra.mxu0 %v145
    %316 = vmatpush.xpose.msra.mxu0 %v142
    %317 = vmatpush.xpose.msra.mxu0 %v139
    %318 = vmatmul.f32.gmra.mxu0 %v88
    %v319 = vpop.f32.mrf.mxu0
    %v320 = vadd.f32 %v84, %v319
    %321 = vdwg.mxu0
    %322 = vmatpush.xpose.msra.mxu0 %v232
    %323 = vmatpush.xpose.msra.mxu0 %v229
    %324 = vmatpush.xpose.msra.mxu0 %v226
    %325 = vmatpush.xpose.msra.mxu0 %v223
    %326 = vmatpush.xpose.msra.mxu0 %v220
    %327 = vmatpush.xpose.msra.mxu0 %v217
    %328 = vmatpush.xpose.msra.mxu0 %v214
    %329 = vmatpush.xpose.msra.mxu0 %v211
    %330 = vmatpush.xpose.msra.mxu0 %v208
    %331 = vmatpush.xpose.msra.mxu0 %v205
    %332 = vmatpush.xpose.msra.mxu0 %v202
    %333 = vmatpush.xpose.msra.mxu0 %v199
    %334 = vmatpush.xpose.msra.mxu0 %v196
    %335 = vmatpush.xpose.msra.mxu0 %v193
    %336 = vmatpush.xpose.msra.mxu0 %v190
    %337 = vmatpush.xpose.msra.mxu0 %v187
    %338 = vmatmul.f32.gmra.mxu0 %v88
    %v339 = vpop.f32.mrf.mxu0
    %v340 = vadd.f32 %v84, %v339
    %341 = vdwg.mxu0
    %342 = vmatpush.xpose.msra.mxu0 %v280
    %343 = vmatpush.xpose.msra.mxu0 %v277
    %344 = vmatpush.xpose.msra.mxu0 %v274
    %345 = vmatpush.xpose.msra.mxu0 %v271
    %346 = vmatpush.xpose.msra.mxu0 %v268
    %347 = vmatpush.xpose.msra.mxu0 %v265
    %348 = vmatpush.xpose.msra.mxu0 %v262
    %349 = vmatpush.xpose.msra.mxu0 %v259
    %350 = vmatpush.xpose.msra.mxu0 %v256
    %351 = vmatpush.xpose.msra.mxu0 %v253
    %352 = vmatpush.xpose.msra.mxu0 %v250
    %353 = vmatpush.xpose.msra.mxu0 %v247
    %354 = vmatpush.xpose.msra.mxu0 %v244
    %355 = vmatpush.xpose.msra.mxu0 %v241
    %356 = vmatpush.xpose.msra.mxu0 %v238
    %357 = vmatpush.xpose.msra.mxu0 %v235
    %358 = vmatmul.f32.gmra.mxu0 %v88
    %v359 = vpop.f32.mrf.mxu0
    %v360 = vadd.f32 %v84, %v359
    %361 = vdwg.mxu0
    %362 = vst [vmem:[#allocation2] sm:$0xff] %v300
    %363 = vst [vmem:[#allocation2 + $0x8] sm:$0xff] %v320
    %364 = vst [vmem:[#allocation2 + $0x10] sm:$0xff] %v340
    %365 = vst [vmem:[#allocation2 + $0x18] sm:$0xff] %v360
    // Predicated region
    $region14: #{linear_forward.1} parent=1 // pred_check
      _
    $region15: #{linear_forward.1} parent=1 // pred_check_branch
      %367 = sbr.rel (0) target = $region17
    $region16: #{linear_forward.1} parent=1 // pred_region
      %369 = vsyncadd [#allocation3], 0
      %s371 = sshll.u32 [#allocation2], 4
      %s372 = int_to_ptr.vmem [resolvable:$true] %s371
      %s373 = sshll.u32 %s3, 4
      %s374 = int_to_ptr.hbm [resolvable:$true] %s373
      %376 = dma.vmem_to_hbm [thread:$0]  %s372, 512, %s374, [#allocation3]
    $region17: #{linear_forward.1} parent=1 // pred_fallthru
      _
    // Predicated region
    $region18: #{linear_forward.1} parent=1 // pred_check
      _
    $region19: #{linear_forward.1} parent=1 // pred_check_branch
      %378 = sbr.rel (0) target = $region21
    $region20: #{linear_forward.1} parent=1 // pred_region
      %380 = dma.done [#allocation3], 512
    $region21: #{linear_forward.1} parent=1 // pred_fallthru
      _
    %381 = vsyncpa [#allocation3], 1

</llo_original>
